<compile_context>
chip_gen: v5e
topology: v5e:2x2
jax: 0.10.0
libtpu: 0.0.40
codegen_flags: <defaults>
</compile_context>

<pallas_src>
import functools

import jax
import jax.numpy as jnp
from jax.experimental import pallas as pl
from jax.experimental.pallas import tpu as pltpu


def _round_up(x, m):
    return ((x + m - 1) // m) * m


def _tpu_params():
    """Best-effort (vmem_capacity_bytes, tensorcores_per_chip) for this chip."""
    vmem_cap = 64 * 1024 * 1024          # conservative fallback (v7x per-core VMEM)
    num_cores = 1
    try:
        info = pltpu.get_tpu_info()
        cap = getattr(info, "vmem_capacity_bytes", None)
        if isinstance(cap, (int, float)) and cap > 0:
            vmem_cap = int(cap)
        nc = getattr(info, "num_tensorcores", None) or getattr(info, "tensorcore_count", None)
        if isinstance(nc, int) and nc > 0:
            num_cores = nc
    except Exception:
        pass
    try:
        if "v7" in jax.devices()[0].device_kind.lower():
            num_cores = max(num_cores, 2)   # megacore: shard the batch axis
    except Exception:
        pass
    return vmem_cap, max(1, min(num_cores, 2))


def _center_loss_kernel(label_ref, feat_ref, center_ref, out_ref, acc_ref, *,
                        b, d, tb, td, n_dt, tiles_per_core, use_matmul):
    dt = pl.program_id(1)
    i = pl.program_id(2)

    @pl.when((dt == 0) & (i == 0))
    def _():
        acc_ref[...] = jnp.zeros_like(acc_ref)

    lbl = label_ref[...]                        # (tb, 1) int32
    ctr = center_ref[...]                       # (C, td), native dtype
    if use_matmul:
        # Small C: gather centers[label] via a one-hot matmul on the otherwise
        # idle MXU (one-hot is exact 0/1 even in bf16; f32 accumulation).
        class_ids = jax.lax.broadcasted_iota(jnp.int32, (tb, ctr.shape[0]), 1)
        one_hot = (lbl == class_ids).astype(ctr.dtype)
        gathered = jnp.dot(one_hot, ctr, preferred_element_type=jnp.float32)
    else:
        # Large C: a direct row gather beats the O(TB*C*td) one-hot matmul.
        idx = lbl.reshape((tb,))
        gathered = jnp.take(ctr, idx, axis=0, mode="clip").astype(jnp.float32)

    diff = feat_ref[...].astype(jnp.float32) - gathered     # (tb, td) f32

    # Mask rows past the true batch (remainder / duplicated clamp tiles) and,
    # if the feature dim is tiled, columns past the true feature dim.
    row_start = (pl.program_id(0) * tiles_per_core + i) * tb
    rows = row_start + jax.lax.broadcasted_iota(jnp.int32, (tb, 1), 0)
    mask = rows < b
    if td != d:
        cols = dt * td + jax.lax.broadcasted_iota(jnp.int32, (1, td), 1)
        mask = jnp.logical_and(mask, cols < d)
    diff = jnp.where(mask, diff, 0.0)

    # Lane-parallel accumulation into a full 8-sublane block (VPU adds only);
    # no per-tile cross-sublane reduce.
    acc_ref[...] += (diff * diff).reshape(tb // 8, 8, td).sum(axis=0)

    @pl.when((dt == n_dt - 1) & (i == pl.num_programs(2) - 1))
    def _():
        total = jnp.sum(acc_ref[...])           # single final reduce per core
        out_ref[...] = jnp.full(out_ref.shape, total, dtype=out_ref.dtype)


def center_loss(label, feat, centers, size_average=True):
    """Pallas CenterLoss forward. label:(B,), feat:(B,...), centers:(C,D)."""
    b = feat.shape[0]
    feat = feat.reshape(b, -1)
    d = feat.shape[1]
    if d != centers.shape[1]:
        raise ValueError(
            "Center's dim: {0} should be equal to input feature's dim: {1}".format(
                centers.shape[1], d))
    c = centers.shape[0]

    # Stream feat/centers in their native dtype when bf16 (halves HBM bytes);
    # all arithmetic is done / accumulated in f32 inside the kernel.
    if feat.dtype not in (jnp.float32, jnp.bfloat16):
        feat = feat.astype(jnp.float32)
    if centers.dtype not in (jnp.float32, jnp.bfloat16):
        centers = centers.astype(jnp.float32)
    label2d = label.astype(jnp.int32).reshape(b, 1)

    bytes_feat = feat.dtype.itemsize
    bytes_ctr = centers.dtype.itemsize
    use_matmul = c <= 512      # one-hot MXU gather for small C, row gather otherwise

    vmem_cap, num_cores = _tpu_params()
    budget = int(0.70 * vmem_cap)
    vmem_limit = int(0.80 * vmem_cap)

    def _vmem_need(tb_, td_):
        lt = _round_up(max(td_, 1), 128)                   # lane padding
        need = 2 * _round_up(c, 8) * lt * bytes_ctr        # resident centers (2 pipeline bufs)
        need += 2 * tb_ * lt * bytes_feat                  # feat stream (double-buffered)
        need += 2 * tb_ * 128 * 4                          # label blocks (lane-padded int32)
        need += 8 * lt * 4 + 2 * 8 * 128 * 4               # accumulator scratch + out block
        need += 4 * tb_ * lt * 4                           # f32 temps (upcast/diff/square/gather)
        if use_matmul:
            need += 2 * tb_ * _round_up(c, 128) * 4        # one-hot + iota temporaries
        return need

    # 1) Tile the feature dim only if the resident centers slab cannot fit at a
    #    healthy batch tile (matters on v7x's 64 MiB VMEM / very large C*D).
    td = d
    if _vmem_need(256, d) > budget:
        td = _round_up(d, 128)
        while td > 128 and _vmem_need(256, td) > budget:
            td = max(128, ((td // 2) // 128) * 128)
    n_dt = pl.cdiv(d, td)

    # 2) Batch tile: as large as the budget allows (amortizes the ~0.35us/step
    #    overhead, keeps the HBM stream near roofline); floor 128 unless B is smaller.
    tb = min(1024, _round_up(b, 8))
    tb_floor = min(128, _round_up(b, 8))
    while tb > tb_floor and _vmem_need(tb, td) > budget:
        tb = max(tb_floor, _round_up(tb // 2, 8))

    n_bt = pl.cdiv(b, tb)                        # number of real batch tiles
    num_cores = max(1, min(num_cores, n_bt))     # don't spawn idle cores
    tiles_per_core = pl.cdiv(n_bt, num_cores)

    kernel = functools.partial(
        _center_loss_kernel, b=b, d=d, tb=tb, td=td, n_dt=n_dt,
        tiles_per_core=tiles_per_core, use_matmul=use_matmul)

    def _row_tile(cix, i):
        # Clamp so no block starts past the array; over-hanging tiles just
        # re-read the last valid block and are fully masked in-kernel.
        return jnp.minimum(cix * tiles_per_core + i, n_bt - 1)

    out = pl.pallas_call(
        kernel,
        out_shape=jax.ShapeDtypeStruct((num_cores * 8, 128), jnp.float32),
        grid_spec=pltpu.PrefetchScalarGridSpec(
            num_scalar_prefetch=0,
            grid=(num_cores, n_dt, tiles_per_core),
            in_specs=[
                # labels for this batch tile
                pl.BlockSpec((tb, 1), lambda cix, dt, i: (_row_tile(cix, i), 0)),
                # features for this batch tile / feature slice (lane-dense, unpadded)
                pl.BlockSpec((tb, td), lambda cix, dt, i: (_row_tile(cix, i), dt)),
                # full-C centers slab (td-wide slice), VMEM-resident across the
                # inner batch loop.  NOTE: the default pipeline double-buffers
                # it; the budget above accounts for both copies.
                pl.BlockSpec((c, td), lambda cix, dt, i: (0, dt)),
            ],
            # one (8,128) partial-sum block per core
            out_specs=pl.BlockSpec((8, 128), lambda cix, dt, i: (cix, 0)),
            scratch_shapes=[pltpu.VMEM((8, td), jnp.float32)],
        ),
        compiler_params=pltpu.CompilerParams(
            dimension_semantics=("parallel", "arbitrary", "arbitrary"),
            vmem_limit_bytes=vmem_limit),
    )(label2d, feat, centers)

    partials = out[::8, 0]                       # one scalar per core
    inv = (0.5 / b) if size_average else 0.5
    return jnp.sum(partials) * inv


if __name__ == "__main__":
    num_classes = 10
    feat_dim = 32
    batch = 8

    key = jax.random.PRNGKey(0)
    k_feat, k_label, k_centers = jax.random.split(key, 3)

    feat = jax.random.normal(k_feat, (batch, feat_dim), dtype=jnp.float32)
    label = jax.random.randint(k_label, (batch,), 0, num_classes, dtype=jnp.int32)
    # nn.Parameter(torch.randn(num_classes, feat_dim)) -> deterministic normal init
    centers = jax.random.normal(k_centers, (num_classes, feat_dim), dtype=jnp.float32)

    loss = center_loss(label, feat, centers, size_average=True)
    loss = jax.block_until_ready(loss)

    # Pure-JAX reference check.
    ref = jnp.sum((feat - centers[label]) ** 2) / 2.0 / batch
    assert jnp.allclose(loss, ref, rtol=1e-5, atol=1e-5), (loss, ref)

    print("KERNEL_OK")
</pallas_src>

<mosaic_0001>
module attributes {stable_mosaic.version = 11 : i64} {
  func.func @_center_loss_kernel(%arg0: i32, %arg1: i32, %arg2: i32, %arg3: memref<8x1xi32, #tpu.memory_space<vmem>>, %arg4: memref<8x32xf32, #tpu.memory_space<vmem>>, %arg5: memref<10x32xf32, #tpu.memory_space<vmem>>, %arg6: memref<8x128xf32, #tpu.memory_space<vmem>>, %arg7: memref<8x32xf32, #tpu.memory_space<vmem>>) attributes {dimension_semantics = [#tpu.dimension_semantics<parallel>, #tpu.dimension_semantics<arbitrary>, #tpu.dimension_semantics<arbitrary>], iteration_bounds = array<i64: 1, 1, 1>, scalar_prefetch = 0 : i64, scratch_operands = 1 : i64, tpu.core_type = #tpu.core_type<tc>, window_params = [{transform_indices = @transform_0, window_bounds = array<i64: 8, 1>}, {transform_indices = @transform_1, window_bounds = array<i64: 8, 32>}, {transform_indices = @transform_2, window_bounds = array<i64: 10, 32>}, {transform_indices = @transform_3, window_bounds = array<i64: 8, 128>}]} {
    %c0_i32 = arith.constant 0 : i32
    %0 = arith.cmpi eq, %arg1, %c0_i32 : i32
    %c0_i32_0 = arith.constant 0 : i32
    %1 = arith.cmpi eq, %arg2, %c0_i32_0 : i32
    %2 = arith.andi %0, %1 : i1
    %3 = arith.extui %2 : i1 to i32
    %c0_i32_1 = arith.constant 0 : i32
    %4 = arith.cmpi ne, %3, %c0_i32_1 : i32
    scf.if %4 {
      %cst_17 = arith.constant 0.000000e+00 : f32
      %38 = vector.broadcast %cst_17 : f32 to vector<8x32xf32>
      %c0_18 = arith.constant 0 : index
      %c0_19 = arith.constant 0 : index
      %39 = vector.load %arg7[%c0_18, %c0_19] : memref<8x32xf32, #tpu.memory_space<vmem>>, vector<8x32xf32>
      tpu.vector_store %arg7[%c0_18, %c0_19], %38 {strides = array<i32>} : memref<8x32xf32, #tpu.memory_space<vmem>>, vector<8x32xf32>,
    } else {
    }
    %c0 = arith.constant 0 : index
    %c0_2 = arith.constant 0 : index
    %5 = vector.load %arg3[%c0, %c0_2] : memref<8x1xi32, #tpu.memory_space<vmem>>, vector<8x1xi32>
    %c0_3 = arith.constant 0 : index
    %c0_4 = arith.constant 0 : index
    %6 = vector.load %arg5[%c0_3, %c0_4] : memref<10x32xf32, #tpu.memory_space<vmem>>, vector<10x32xf32>
    %7 = tpu.iota {dimensions = array<i32: 1>} : vector<8x10xi32>
    %8 = vector.broadcast %5 : vector<8x1xi32> to vector<8x10xi32>
    %9 = arith.cmpi eq, %8, %7 : vector<8x10xi32>
    %10 = arith.extui %9 : vector<8x10xi1> to vector<8x10xi32>
    %11 = arith.sitofp %10 : vector<8x10xi32> to vector<8x10xf32>
    %cst = arith.constant dense<0.000000e+00> : vector<8x32xf32>
    %12 = tpu.matmul %11, %6, %cst {dimension_numbers = #tpu.dot_dimension_numbers<[1], [0], [0], [1], [0, 0, 1, 1], [], []>} : vector<8x10xf32>, vector<10x32xf32>, vector<8x32xf32> -> vector<8x32xf32>
    %c0_5 = arith.constant 0 : index
    %c0_6 = arith.constant 0 : index
    %13 = vector.load %arg4[%c0_5, %c0_6] : memref<8x32xf32, #tpu.memory_space<vmem>>, vector<8x32xf32>
    %14 = arith.subf %13, %12 : vector<8x32xf32>
    %c1_i32 = arith.constant 1 : i32
    %15 = arith.muli %arg0, %c1_i32 : i32
    %16 = arith.addi %15, %arg2 : i32
    %c8_i32 = arith.constant 8 : i32
    %17 = arith.muli %16, %c8_i32 : i32
    %18 = tpu.iota {dimensions = array<i32: 0>} : vector<8x1xi32>
    %19 = vector.broadcast %17 : i32 to vector<8x1xi32>
    %20 = arith.addi %19, %18 : vector<8x1xi32>
    %c8_i32_7 = arith.constant 8 : i32
    %21 = vector.broadcast %c8_i32_7 : i32 to vector<8x1xi32>
    %22 = arith.cmpi slt, %20, %21 : vector<8x1xi32>
    %cst_8 = arith.constant 0.000000e+00 : f32
    %23 = vector.shape_cast %22 : vector<8x1xi1> to vector<8x1xi1>
    %24 = vector.broadcast %23 : vector<8x1xi1> to vector<8x32xi1>
    %25 = vector.broadcast %cst_8 : f32 to vector<8x32xf32>
    %26 = arith.select %24, %14, %25 : vector<8x32xi1>, vector<8x32xf32>
    %c0_9 = arith.constant 0 : index
    %c0_10 = arith.constant 0 : index
    %27 = vector.load %arg7[%c0_9, %c0_10] : memref<8x32xf32, #tpu.memory_space<vmem>>, vector<8x32xf32>
    %28 = arith.mulf %26, %26 : vector<8x32xf32>
    %29 = vector.shape_cast %28 : vector<8x32xf32> to vector<1x8x32xf32>
    %cst_11 = arith.constant dense<0.000000e+00> : vector<8x32xf32>
    %30 = vector.multi_reduction <add>, %29, %cst_11 [0] : vector<1x8x32xf32> to vector<8x32xf32>
    %31 = arith.addf %27, %30 : vector<8x32xf32>
    %c0_12 = arith.constant 0 : index
    %c0_13 = arith.constant 0 : index
    %32 = vector.load %arg7[%c0_12, %c0_13] : memref<8x32xf32, #tpu.memory_space<vmem>>, vector<8x32xf32>
    tpu.vector_store %arg7[%c0_12, %c0_13], %31 {strides = array<i32>} : memref<8x32xf32, #tpu.memory_space<vmem>>, vector<8x32xf32>,
    %c0_i32_14 = arith.constant 0 : i32
    %33 = arith.cmpi eq, %arg1, %c0_i32_14 : i32
    %c0_i32_15 = arith.constant 0 : i32
    %34 = arith.cmpi eq, %arg2, %c0_i32_15 : i32
    %35 = arith.andi %33, %34 : i1
    %36 = arith.extui %35 : i1 to i32
    %c0_i32_16 = arith.constant 0 : i32
    %37 = arith.cmpi ne, %36, %c0_i32_16 : i32
    scf.if %37 {
      %c0_17 = arith.constant 0 : index
      %c0_18 = arith.constant 0 : index
      %38 = vector.load %arg7[%c0_17, %c0_18] : memref<8x32xf32, #tpu.memory_space<vmem>>, vector<8x32xf32>
      %39 = vector.shape_cast %38 : vector<8x32xf32> to vector<1x8x32xf32>
      %cst_19 = arith.constant dense<0.000000e+00> : vector<1xf32>
      %40 = vector.multi_reduction <add>, %39, %cst_19 [1, 2] : vector<1x8x32xf32> to vector<1xf32>
      %41 = vector.shape_cast %40 : vector<1xf32> to vector<1x1x1xf32>
      %42 = vector.extract %41[0, 0, 0] : f32 from vector<1x1x1xf32>
      %43 = vector.broadcast %42 : f32 to vector<8x128xf32>
      %c0_20 = arith.constant 0 : index
      %c0_21 = arith.constant 0 : index
      %44 = vector.load %arg6[%c0_20, %c0_21] : memref<8x128xf32, #tpu.memory_space<vmem>>, vector<8x128xf32>
      tpu.vector_store %arg6[%c0_20, %c0_21], %43 {strides = array<i32>} : memref<8x128xf32, #tpu.memory_space<vmem>>, vector<8x128xf32>,
    } else {
    }
    return
  }
  func.func @transform_0(%arg0: i32, %arg1: i32, %arg2: i32) -> (i32, i32) {
    %c1_i32 = arith.constant 1 : i32
    %0 = arith.muli %arg0, %c1_i32 : i32
    %1 = arith.addi %0, %arg2 : i32
    %c0_i32 = arith.constant 0 : i32
    %2 = arith.minsi %1, %c0_i32 : i32
    %c0_i32_0 = arith.constant 0 : i32
    %c0_i32_1 = arith.constant 0 : i32
    return %2, %c0_i32_0 : i32, i32
  }
  func.func @transform_1(%arg0: i32, %arg1: i32, %arg2: i32) -> (i32, i32) {
    %c1_i32 = arith.constant 1 : i32
    %0 = arith.muli %arg0, %c1_i32 : i32
    %1 = arith.addi %0, %arg2 : i32
    %c0_i32 = arith.constant 0 : i32
    %2 = arith.minsi %1, %c0_i32 : i32
    %c0_i32_0 = arith.constant 0 : i32
    return %2, %arg1 : i32, i32
  }
  func.func @transform_2(%arg0: i32, %arg1: i32, %arg2: i32) -> (i32, i32) {
    %c0_i32 = arith.constant 0 : i32
    %c0_i32_0 = arith.constant 0 : i32
    return %c0_i32, %arg1 : i32, i32
  }
  func.func @transform_3(%arg0: i32, %arg1: i32, %arg2: i32) -> (i32, i32) {
    %c0_i32 = arith.constant 0 : i32
    %c0_i32_0 = arith.constant 0 : i32
    return %arg0, %c0_i32 : i32, i32
  }
}

</mosaic_0001>

<llo_original>
// kernel: tpu_custom_call.1
$region0: #{tpu_custom_call.1}
  #allocation0 [shape = 'u32[]', space=smem, size = 0x4, offset = 0x4, fixed_abs, tag = 'smem constant byte address 0x4 - core index']
  #allocation1 [shape = 'u32[72,128]{1,0:T(1,128)}', space=vmem, size = 0x9000, scoped, tag = 'internal scratch']
  #allocation2 [shape = 'f32[8,32]{1,0:T(8,128)}', space=vmem, size = 0x1000, scoped, tag = 'scratch operand']
  %s0 = inlined_call_operand.vmem [shape: s32[8,1], index: 0, kind: input, shape index: {}]
  %s1 = inlined_call_operand.vmem [shape: f32[8,32], index: 1, kind: input, shape index: {}]
  %s2 = inlined_call_operand.hbm [shape: f32[10,32], index: 2, kind: input, shape index: {}]
  %s3 = inlined_call_operand.hbm [shape: f32[8,128], index: 3, kind: output, shape index: {}]
  %s4 = sld [smem:[#allocation0]]
  $region34: #{tpu_custom_call.1} parent=0
    _
  %s6 = ssub.s32 1, %s4
  %s7 = scalar_select 0, %s6, %s4
  $region1: #{tpu_custom_call.1} parent=0
    #allocation3 [shape = 'u8[8192]{0}', space=vmem, size = 0x2000, scoped, tag = 'input window, operand 2, single buffered']
    #allocation4 [shape = 's32[1]{0}', space=sflag, size = 0x4, scoped, tag = 'scoped memory for tpu_custom_call.1']
    #allocation5 [shape = 's32[1]{0}', space=sflag, size = 0x4, scoped, tag = 'scoped memory for tpu_custom_call.1']
    #allocation6 [shape = 'u8[4096]{0}', space=vmem, size = 0x1000, scoped, tag = 'output window, operand 0, single buffered']
    %8 = vsyncpa [#allocation4], 0
    %9 = vsyncpa [#allocation5], 0
    // Predicated region
    $region2: #{tpu_custom_call.1} parent=1 // pred_check
      _
    $region3: #{tpu_custom_call.1} parent=1 // pred_check_branch
      %11 = sbr.rel (0) target = $region5
    $region4: #{tpu_custom_call.1} parent=1 // pred_region
      %s12 = sadd.s32 0, 0
      %p13 = scmp.lt.s32.totalorder %s12, 0
      %s14 = scalar_select %p13, %s12, 0
      %p15 = scmp.lt.s32.totalorder %s14, 0
      %s16 = scalar_select %p15, %s14, 0
      %s17 = smul.addr %s16, 8
      %s18 = scalar_lea.vmem %s0, %s17
      %s19 = sadd.s32 0, 0
      %p20 = scmp.lt.s32.totalorder %s19, 0
      %s21 = scalar_select %p20, %s19, 0
    $region5: #{tpu_custom_call.1} parent=1 // pred_fallthru
      _
    // Predicated region
    $region6: #{tpu_custom_call.1} parent=1 // pred_check
      _
    $region7: #{tpu_custom_call.1} parent=1 // pred_check_branch
      %23 = sbr.rel (0) target = $region9
    $region8: #{tpu_custom_call.1} parent=1 // pred_region
      %s24 = sadd.s32 0, 0
      %p25 = scmp.lt.s32.totalorder %s24, 0
      %s26 = scalar_select %p25, %s24, 0
      %p27 = scmp.lt.s32.totalorder %s26, 0
      %s28 = scalar_select %p27, %s26, 0
      %s29 = smul.addr %s28, 8
      %s30 = scalar_lea.vmem %s1, %s29
      %s31 = sadd.s32 0, 0
      %p32 = scmp.lt.s32.totalorder %s31, 0
      %s33 = scalar_select %p32, %s31, 0
    $region9: #{tpu_custom_call.1} parent=1 // pred_fallthru
      _
    // Predicated region
    $region10: #{tpu_custom_call.1} parent=1 // pred_check
      _
    $region11: #{tpu_custom_call.1} parent=1 // pred_check_branch
      %35 = sbr.rel (0) target = $region13
    $region12: #{tpu_custom_call.1} parent=1 // pred_region
      %37 = vsyncadd [#allocation4], 0
      %s38 = sshll.u32 %s2, 4
      %s39 = int_to_ptr.hbm [resolvable:$true] %s38
      %s40 = sshll.u32 [#allocation3], 4
      %s41 = int_to_ptr.vmem [resolvable:$true] %s40
      %46 = dma.hbm_to_vmem [thread:$0]  %s39, 256, %s41, [#allocation4], 128, 128, 8
    $region13: #{tpu_custom_call.1} parent=1 // pred_fallthru
      _
    // Predicated region
    $region14: #{tpu_custom_call.1} parent=1 // pred_check
      _
    $region15: #{tpu_custom_call.1} parent=1 // pred_check_branch
      %48 = sbr.rel (0) target = $region17
    $region16: #{tpu_custom_call.1} parent=1 // pred_region
      %50 = dma.done [#allocation4], 256
    $region17: #{tpu_custom_call.1} parent=1 // pred_fallthru
      _
    %s51 = sadd.s32 0, 0
    %p52 = scmp.lt.s32.totalorder %s51, 0
    %s53 = scalar_select %p52, %s51, 0
    %p54 = scmp.lt.s32.totalorder %s53, 0
    %s55 = scalar_select %p54, %s53, 0
    %s56 = smul.addr %s55, 8
    %s57 = scalar_lea.vmem %s0, %s56
    %s58 = sadd.s32 0, 0
    %p59 = scmp.lt.s32.totalorder %s58, 0
    %s60 = scalar_select %p59, %s58, 0
    %p61 = scmp.lt.s32.totalorder %s60, 0
    %s62 = scalar_select %p61, %s60, 0
    %s63 = smul.addr %s62, 8
    %s64 = scalar_lea.vmem %s1, %s63
    %s65 = sadd.s32 0, 0
    %p66 = scmp.lt.s32.totalorder %s65, 0
    %s67 = scalar_select %p66, %s65, 0
    %p68 = scmp.lt.s32.totalorder %s67, 0
    %s69 = scalar_select %p68, %s67, 0
    %s70 = smul.addr %s69, 8
    %s71 = scalar_lea.vmem %s0, %s70
    %s72 = sadd.s32 0, 0
    %p73 = scmp.lt.s32.totalorder %s72, 0
    %s74 = scalar_select %p73, %s72, 0
    %s75 = sadd.s32 0, 0
    %p76 = scmp.lt.s32.totalorder %s75, 0
    %s77 = scalar_select %p76, %s75, 0
    %p78 = scmp.lt.s32.totalorder %s77, 0
    %s79 = scalar_select %p78, %s77, 0
    %s80 = smul.addr %s79, 8
    %s81 = scalar_lea.vmem %s1, %s80
    %s82 = sadd.s32 0, 0
    %p83 = scmp.lt.s32.totalorder %s82, 0
    %s84 = scalar_select %p83, %s82, 0
    %p85 = scmp.eq.s32.totalorder 0, 0
    %p86 = scmp.eq.s32.totalorder 0, 0
    %p87 = pnand %p85, %p86
    %p88 = pneg %p87
    // Predicated region
    $region18: #{tpu_custom_call.1} parent=1 // pred_check
      _
    $region19: #{tpu_custom_call.1} parent=1 // pred_check_branch
      %90 = sbr.rel (%p87) target = $region21
    $region20: #{tpu_custom_call.1} parent=1 // pred_region
      %vm91 = vcmask 261120
      %92 = vst.msk [vmem:[#allocation2] sm:$0xff] %vm91, 0.0
    $region21: #{tpu_custom_call.1} parent=1 // pred_fallthru
      _
    %v93 = vld [vmem:[%s71] sm:$0xff]
    %v94 = vld [vmem:[#allocation3] sm:$0xff]
    %v95 = vld [vmem:[#allocation3 + $0x8] sm:$0x3]
    %v96 = vlaneseq
    %v97 = vand.u32 %v96, 127
    %98 = vset.pattern.permute.xlu0 0
    %99 = vperm.xlu0 %98, %v93
    %v100 = vpop.permute.xlu0 %99
    %vm101 = vcmp.eq.s32.totalorder %v100, %v97
    %v102 = vsel %vm101, 1, 0
    %v103 = vcvt.s32.f32 %v102
    %vm104 = vcmask 80896
    %v106 = vsel %vm104, %v103, 0
    %vm108 = vcmask 1041408
    %v110 = vsel %vm108, %v95, 0
    %112 = vmatpush.msra.mxu0 0.0
    %113 = vmatpush.msra.mxu0 0.0
    %114 = vmatpush.msra.mxu0 0.0
    %115 = vmatpush.msra.mxu0 0.0
    %116 = vmatpush.msra.mxu0 0.0
    %117 = vmatpush.msra.mxu0 0.0
    %118 = vmatpush.msra.mxu0 0.0
    %119 = vmatpush.msra.mxu0 0.0
    %120 = vmatpush.msra.mxu0 0.0
    %121 = vmatpush.msra.mxu0 0.0
    %122 = vmatpush.msra.mxu0 0.0
    %123 = vmatpush.msra.mxu0 0.0
    %124 = vmatpush.msra.mxu0 0.0
    %125 = vmatpush.msra.mxu0 0.0
    %126 = vmatpush.msra.mxu0 %v110
    %127 = vmatpush.msra.mxu0 %v94
    %128 = vmatmul.f32.gmra.mxu0 %v106
    %v129 = vpop.f32.mrf.mxu0
    %v130 = vadd.f32 0.0, %v129
    %131 = vdwg.mxu0
    %v132 = vld [vmem:[%s81] sm:$0xff]
    %v133 = vsub.f32 %v132, %v130
    %s134 = sadd.s32 0, 0
    %s135 = smul.u32 %s134, 8
    %v136 = vlaneseq
    %v137 = vshrl.u32 %v136, 7
    %v138 = vstv %s135
    %v139 = vadd.s32 %v138, %v137
    %vm140 = vcmp.lt.s32.totalorder %v139, 8
    %v141 = vsel %vm140, 1, 0
    %vm142 = vcmp.eq.s32.totalorder %v141, 1
    %v143 = vsel %vm142, %v133, 0.0
    %v144 = vld [vmem:[#allocation2] sm:$0xff]
    %v145 = vmul.f32 %v143, %v143
    %v146 = vadd.f32 %v145, 0.0
    %v147 = vadd.f32 %v144, %v146
    %vm148 = vcmask 261120
    %149 = vst.msk [vmem:[#allocation2] sm:$0xff] %vm148, %v147
    // Predicated region
    $region22: #{tpu_custom_call.1} parent=1 // pred_check
      _
    $region23: #{tpu_custom_call.1} parent=1 // pred_check_branch
      %151 = sbr.rel (%p87) target = $region25
    $region24: #{tpu_custom_call.1} parent=1 // pred_region
      %v152 = vld [vmem:[#allocation2] sm:$0xff]
      %v153 = vsel %vm148, %v152, 0.0
      %154 = vadd.xlane.f32.xlu0 %v153
      %v155 = vpop.xlane.xlu0 %154
      %v156 = vrot.slane %v155, 4
      %v157 = vadd.f32 %v155, %v156
      %v158 = vrot.slane %v157, 2
      %v159 = vadd.f32 %v157, %v158
      %v160 = vrot.slane %v159, 1
      %v161 = vadd.f32 %v159, %v160
      %s162 = vtos %v161
      %v163 = vstv %s162
      %164 = vst [vmem:[#allocation6] sm:$0xff] %v163
    $region25: #{tpu_custom_call.1} parent=1 // pred_fallthru
      _
    // Predicated region
    $region26: #{tpu_custom_call.1} parent=1 // pred_check
      _
    $region27: #{tpu_custom_call.1} parent=1 // pred_check_branch
      %166 = sbr.rel (0) target = $region29
    $region28: #{tpu_custom_call.1} parent=1 // pred_region
      %168 = vsyncadd [#allocation5], 0
      %s170 = sshll.u32 [#allocation6], 4
      %s171 = int_to_ptr.vmem [resolvable:$true] %s170
      %s172 = sshll.u32 %s3, 4
      %s173 = int_to_ptr.hbm [resolvable:$true] %s172
      %175 = dma.vmem_to_hbm [thread:$0]  %s171, 128, %s173, [#allocation5]
    $region29: #{tpu_custom_call.1} parent=1 // pred_fallthru
      _
    // Predicated region
    $region30: #{tpu_custom_call.1} parent=1 // pred_check
      _
    $region31: #{tpu_custom_call.1} parent=1 // pred_check_branch
      %177 = sbr.rel (0) target = $region33
    $region32: #{tpu_custom_call.1} parent=1 // pred_region
      %179 = dma.done [#allocation5], 128
    $region33: #{tpu_custom_call.1} parent=1 // pred_fallthru
      _
    %180 = vsyncpa [#allocation4], 1
    %181 = vsyncpa [#allocation5], 1

</llo_original>
